<compile_context>
chip_gen: v5e
topology: v5e:2x2
jax: 0.10.0
libtpu: 0.0.40
codegen_flags: <defaults>
</compile_context>

<pallas_src>
import functools

import jax
import jax.numpy as jnp
from jax.experimental import pallas as pl
from jax.experimental.pallas import tpu as pltpu


def _dwconv_kernel(w_ref, b_ref, x_ref, o_ref, *, depth, k_h, k_w, h_out, w_out):
    """Depthwise conv for one (batch, input-channel) plane.

    w_ref : SMEM (C*depth*k_h*k_w,) f32 -- PyTorch (C*depth, 1, kH, kW) flattened
    b_ref : SMEM (C*depth,)         f32
    x_ref : VMEM (H+2p, W+2p)           -- zero-padded input plane
    o_ref : VMEM (depth, h_out, w_out)
    """
    c = pl.program_id(1)                      # input-channel index (scalar unit)
    xp = x_ref[...].astype(jnp.float32)       # whole padded plane in vregs
    for d in range(depth):                    # unrolled: `depth` output channels
        oc = c * depth + d                    # PyTorch grouped-conv channel order
        acc = jnp.full((h_out, w_out), b_ref[oc], dtype=jnp.float32)
        for di in range(k_h):                 # unrolled 3x3 taps: scalar * plane
            for dj in range(k_w):
                w = w_ref[oc * (k_h * k_w) + di * k_w + dj]
                acc = acc + w * xp[di:di + h_out, dj:dj + w_out]
        o_ref[d, :, :] = acc.astype(o_ref.dtype)


def depthwise_conv2d(x, weight, bias, *, depth, kernel_size=3, padding=1, stride=1):
    """Forward pass of DepthwiseConv2d. x: (N,C,H,W), weight: (C*depth,1,kH,kW)."""
    if stride != 1:
        # TODO(synk): stride > 1 not implemented (module default stride=1).
        raise NotImplementedError("stride != 1 not supported")
    n, c, h, w = x.shape
    k_h = k_w = kernel_size
    h_out = h + 2 * padding - k_h + 1
    w_out = w + 2 * padding - k_w + 1
    h_p, w_p = h + 2 * padding, w + 2 * padding

    # Semantically required zero padding (done once in HBM by XLA).
    xp = jnp.pad(x, ((0, 0), (0, 0), (padding, padding), (padding, padding)))
    w_flat = weight.reshape(-1).astype(jnp.float32)   # (C*depth*kH*kW,)
    b_flat = bias.reshape(-1).astype(jnp.float32)     # (C*depth,)

    kernel = functools.partial(
        _dwconv_kernel, depth=depth, k_h=k_h, k_w=k_w, h_out=h_out, w_out=w_out)

    out5 = pl.pallas_call(
        kernel,
        out_shape=jax.ShapeDtypeStruct((n, c, depth, h_out, w_out), x.dtype),
        grid=(n, c),
        in_specs=[
            pl.BlockSpec(memory_space=pltpu.MemorySpace.SMEM),   # weights (flat)
            pl.BlockSpec(memory_space=pltpu.MemorySpace.SMEM),   # bias (flat)
            pl.BlockSpec((None, None, h_p, w_p),                 # padded plane
                         lambda i, j: (i, j, 0, 0)),
        ],
        out_specs=pl.BlockSpec((None, None, depth, h_out, w_out),
                               lambda i, j: (i, j, 0, 0, 0)),
        compiler_params=pltpu.CompilerParams(
            dimension_semantics=("parallel", "parallel")),
    )(w_flat, b_flat, xp)

    # Contiguous reshape: (N, C, depth, H, W) -> (N, C*depth, H, W)
    return out5.reshape(n, c * depth, h_out, w_out)


if __name__ == "__main__":
    key = jax.random.PRNGKey(0)
    k_x, k_w, k_b = jax.random.split(key, 3)

    N, C, H, W = 2, 4, 16, 16
    depth, ksize, pad, stride = 2, 3, 1, 1

    x = jax.random.normal(k_x, (N, C, H, W), dtype=jnp.float32)
    # PyTorch layout: weight (C*depth, 1, kH, kW), bias (C*depth,)
    weight = jax.random.normal(k_w, (C * depth, 1, ksize, ksize), dtype=jnp.float32) * 0.1
    bias = jax.random.normal(k_b, (C * depth,), dtype=jnp.float32) * 0.1

    out = depthwise_conv2d(x, weight, bias, depth=depth,
                           kernel_size=ksize, padding=pad, stride=stride)
    out = jax.block_until_ready(out)

    # Reference: grouped conv in plain JAX (equivalent to PyTorch depthwise conv).
    ref = jax.lax.conv_general_dilated(
        x, weight, window_strides=(stride, stride),
        padding=((pad, pad), (pad, pad)),
        dimension_numbers=("NCHW", "OIHW", "NCHW"),
        feature_group_count=C,
    ) + bias[None, :, None, None]

    assert out.shape == (N, C * depth, H, W), out.shape
    assert jnp.allclose(out, ref, atol=1e-5, rtol=1e-5), float(jnp.max(jnp.abs(out - ref)))

    print("KERNEL_OK")
</pallas_src>

<mosaic_0001>
module attributes {stable_mosaic.version = 11 : i64} {
  func.func @_dwconv_kernel(%arg0: i32, %arg1: i32, %arg2: memref<72xf32, #tpu.memory_space<smem>>, %arg3: memref<8xf32, #tpu.memory_space<smem>>, %arg4: memref<1x1x18x18xf32, #tpu.memory_space<vmem>>, %arg5: memref<1x1x2x16x16xf32, #tpu.memory_space<vmem>>) attributes {dimension_semantics = [#tpu.dimension_semantics<parallel>, #tpu.dimension_semantics<parallel>], iteration_bounds = array<i64: 2, 4>, scalar_prefetch = 0 : i64, scratch_operands = 0 : i64, tpu.core_type = #tpu.core_type<tc>, window_params = [{transform_indices = @transform_0, window_bounds = array<i64: 72>}, {transform_indices = @transform_1, window_bounds = array<i64: 8>}, {transform_indices = @transform_2, window_bounds = array<i64: 1, 1, 18, 18>}, {transform_indices = @transform_3, window_bounds = array<i64: 1, 1, 2, 16, 16>}]} {
    %c0 = arith.constant 0 : index
    %c0_0 = arith.constant 0 : index
    %c0_1 = arith.constant 0 : index
    %c0_2 = arith.constant 0 : index
    %0 = vector.load %arg4[%c0, %c0_0, %c0_1, %c0_2] : memref<1x1x18x18xf32, #tpu.memory_space<vmem>>, vector<1x1x18x18xf32>
    %1 = vector.shape_cast %0 : vector<1x1x18x18xf32> to vector<18x18xf32>
    %c2_i32 = arith.constant 2 : i32
    %2 = arith.muli %arg1, %c2_i32 : i32
    %c0_i32 = arith.constant 0 : i32
    %3 = arith.addi %2, %c0_i32 : i32
    %4 = arith.index_cast %3 : i32 to index
    %5 = memref.load %arg3[%4] : memref<8xf32, #tpu.memory_space<smem>>
    %6 = vector.broadcast %5 : f32 to vector<16x16xf32>
    %c9_i32 = arith.constant 9 : i32
    %7 = arith.muli %3, %c9_i32 : i32
    %c0_i32_3 = arith.constant 0 : i32
    %8 = arith.addi %7, %c0_i32_3 : i32
    %c0_i32_4 = arith.constant 0 : i32
    %9 = arith.addi %8, %c0_i32_4 : i32
    %10 = arith.index_cast %9 : i32 to index
    %11 = memref.load %arg2[%10] : memref<72xf32, #tpu.memory_space<smem>>
    %12 = vector.extract_strided_slice %1 {offsets = [0, 0], sizes = [16, 16], strides = [1, 1]} : vector<18x18xf32> to vector<16x16xf32>
    %13 = vector.broadcast %11 : f32 to vector<16x16xf32>
    %14 = arith.mulf %13, %12 : vector<16x16xf32>
    %15 = arith.addf %6, %14 : vector<16x16xf32>
    %c9_i32_5 = arith.constant 9 : i32
    %16 = arith.muli %3, %c9_i32_5 : i32
    %c0_i32_6 = arith.constant 0 : i32
    %17 = arith.addi %16, %c0_i32_6 : i32
    %c1_i32 = arith.constant 1 : i32
    %18 = arith.addi %17, %c1_i32 : i32
    %19 = arith.index_cast %18 : i32 to index
    %20 = memref.load %arg2[%19] : memref<72xf32, #tpu.memory_space<smem>>
    %21 = vector.extract_strided_slice %1 {offsets = [0, 1], sizes = [16, 16], strides = [1, 1]} : vector<18x18xf32> to vector<16x16xf32>
    %22 = vector.broadcast %20 : f32 to vector<16x16xf32>
    %23 = arith.mulf %22, %21 : vector<16x16xf32>
    %24 = arith.addf %15, %23 : vector<16x16xf32>
    %c9_i32_7 = arith.constant 9 : i32
    %25 = arith.muli %3, %c9_i32_7 : i32
    %c0_i32_8 = arith.constant 0 : i32
    %26 = arith.addi %25, %c0_i32_8 : i32
    %c2_i32_9 = arith.constant 2 : i32
    %27 = arith.addi %26, %c2_i32_9 : i32
    %28 = arith.index_cast %27 : i32 to index
    %29 = memref.load %arg2[%28] : memref<72xf32, #tpu.memory_space<smem>>
    %30 = vector.extract_strided_slice %1 {offsets = [0, 2], sizes = [16, 16], strides = [1, 1]} : vector<18x18xf32> to vector<16x16xf32>
    %31 = vector.broadcast %29 : f32 to vector<16x16xf32>
    %32 = arith.mulf %31, %30 : vector<16x16xf32>
    %33 = arith.addf %24, %32 : vector<16x16xf32>
    %c9_i32_10 = arith.constant 9 : i32
    %34 = arith.muli %3, %c9_i32_10 : i32
    %c3_i32 = arith.constant 3 : i32
    %35 = arith.addi %34, %c3_i32 : i32
    %c0_i32_11 = arith.constant 0 : i32
    %36 = arith.addi %35, %c0_i32_11 : i32
    %37 = arith.index_cast %36 : i32 to index
    %38 = memref.load %arg2[%37] : memref<72xf32, #tpu.memory_space<smem>>
    %39 = vector.extract_strided_slice %1 {offsets = [1, 0], sizes = [16, 16], strides = [1, 1]} : vector<18x18xf32> to vector<16x16xf32>
    %40 = vector.broadcast %38 : f32 to vector<16x16xf32>
    %41 = arith.mulf %40, %39 : vector<16x16xf32>
    %42 = arith.addf %33, %41 : vector<16x16xf32>
    %c9_i32_12 = arith.constant 9 : i32
    %43 = arith.muli %3, %c9_i32_12 : i32
    %c3_i32_13 = arith.constant 3 : i32
    %44 = arith.addi %43, %c3_i32_13 : i32
    %c1_i32_14 = arith.constant 1 : i32
    %45 = arith.addi %44, %c1_i32_14 : i32
    %46 = arith.index_cast %45 : i32 to index
    %47 = memref.load %arg2[%46] : memref<72xf32, #tpu.memory_space<smem>>
    %48 = vector.extract_strided_slice %1 {offsets = [1, 1], sizes = [16, 16], strides = [1, 1]} : vector<18x18xf32> to vector<16x16xf32>
    %49 = vector.broadcast %47 : f32 to vector<16x16xf32>
    %50 = arith.mulf %49, %48 : vector<16x16xf32>
    %51 = arith.addf %42, %50 : vector<16x16xf32>
    %c9_i32_15 = arith.constant 9 : i32
    %52 = arith.muli %3, %c9_i32_15 : i32
    %c3_i32_16 = arith.constant 3 : i32
    %53 = arith.addi %52, %c3_i32_16 : i32
    %c2_i32_17 = arith.constant 2 : i32
    %54 = arith.addi %53, %c2_i32_17 : i32
    %55 = arith.index_cast %54 : i32 to index
    %56 = memref.load %arg2[%55] : memref<72xf32, #tpu.memory_space<smem>>
    %57 = vector.extract_strided_slice %1 {offsets = [1, 2], sizes = [16, 16], strides = [1, 1]} : vector<18x18xf32> to vector<16x16xf32>
    %58 = vector.broadcast %56 : f32 to vector<16x16xf32>
    %59 = arith.mulf %58, %57 : vector<16x16xf32>
    %60 = arith.addf %51, %59 : vector<16x16xf32>
    %c9_i32_18 = arith.constant 9 : i32
    %61 = arith.muli %3, %c9_i32_18 : i32
    %c6_i32 = arith.constant 6 : i32
    %62 = arith.addi %61, %c6_i32 : i32
    %c0_i32_19 = arith.constant 0 : i32
    %63 = arith.addi %62, %c0_i32_19 : i32
    %64 = arith.index_cast %63 : i32 to index
    %65 = memref.load %arg2[%64] : memref<72xf32, #tpu.memory_space<smem>>
    %66 = vector.extract_strided_slice %1 {offsets = [2, 0], sizes = [16, 16], strides = [1, 1]} : vector<18x18xf32> to vector<16x16xf32>
    %67 = vector.broadcast %65 : f32 to vector<16x16xf32>
    %68 = arith.mulf %67, %66 : vector<16x16xf32>
    %69 = arith.addf %60, %68 : vector<16x16xf32>
    %c9_i32_20 = arith.constant 9 : i32
    %70 = arith.muli %3, %c9_i32_20 : i32
    %c6_i32_21 = arith.constant 6 : i32
    %71 = arith.addi %70, %c6_i32_21 : i32
    %c1_i32_22 = arith.constant 1 : i32
    %72 = arith.addi %71, %c1_i32_22 : i32
    %73 = arith.index_cast %72 : i32 to index
    %74 = memref.load %arg2[%73] : memref<72xf32, #tpu.memory_space<smem>>
    %75 = vector.extract_strided_slice %1 {offsets = [2, 1], sizes = [16, 16], strides = [1, 1]} : vector<18x18xf32> to vector<16x16xf32>
    %76 = vector.broadcast %74 : f32 to vector<16x16xf32>
    %77 = arith.mulf %76, %75 : vector<16x16xf32>
    %78 = arith.addf %69, %77 : vector<16x16xf32>
    %c9_i32_23 = arith.constant 9 : i32
    %79 = arith.muli %3, %c9_i32_23 : i32
    %c6_i32_24 = arith.constant 6 : i32
    %80 = arith.addi %79, %c6_i32_24 : i32
    %c2_i32_25 = arith.constant 2 : i32
    %81 = arith.addi %80, %c2_i32_25 : i32
    %82 = arith.index_cast %81 : i32 to index
    %83 = memref.load %arg2[%82] : memref<72xf32, #tpu.memory_space<smem>>
    %84 = vector.extract_strided_slice %1 {offsets = [2, 2], sizes = [16, 16], strides = [1, 1]} : vector<18x18xf32> to vector<16x16xf32>
    %85 = vector.broadcast %83 : f32 to vector<16x16xf32>
    %86 = arith.mulf %85, %84 : vector<16x16xf32>
    %87 = arith.addf %78, %86 : vector<16x16xf32>
    %c0_26 = arith.constant 0 : index
    %c0_27 = arith.constant 0 : index
    %c0_28 = arith.constant 0 : index
    %c0_29 = arith.constant 0 : index
    %c0_30 = arith.constant 0 : index
    %88 = vector.load %arg5[%c0_26, %c0_27, %c0_28, %c0_29, %c0_30] : memref<1x1x2x16x16xf32, #tpu.memory_space<vmem>>, vector<1x1x1x16x16xf32>
    %89 = vector.shape_cast %88 : vector<1x1x1x16x16xf32> to vector<16x16xf32>
    %90 = vector.shape_cast %87 : vector<16x16xf32> to vector<1x1x1x16x16xf32>
    tpu.vector_store %arg5[%c0_26, %c0_27, %c0_28, %c0_29, %c0_30], %90 {strides = array<i32>} : memref<1x1x2x16x16xf32, #tpu.memory_space<vmem>>, vector<1x1x1x16x16xf32>,
    %c2_i32_31 = arith.constant 2 : i32
    %91 = arith.muli %arg1, %c2_i32_31 : i32
    %c1_i32_32 = arith.constant 1 : i32
    %92 = arith.addi %91, %c1_i32_32 : i32
    %93 = arith.index_cast %92 : i32 to index
    %94 = memref.load %arg3[%93] : memref<8xf32, #tpu.memory_space<smem>>
    %95 = vector.broadcast %94 : f32 to vector<16x16xf32>
    %c9_i32_33 = arith.constant 9 : i32
    %96 = arith.muli %92, %c9_i32_33 : i32
    %c0_i32_34 = arith.constant 0 : i32
    %97 = arith.addi %96, %c0_i32_34 : i32
    %c0_i32_35 = arith.constant 0 : i32
    %98 = arith.addi %97, %c0_i32_35 : i32
    %99 = arith.index_cast %98 : i32 to index
    %100 = memref.load %arg2[%99] : memref<72xf32, #tpu.memory_space<smem>>
    %101 = vector.extract_strided_slice %1 {offsets = [0, 0], sizes = [16, 16], strides = [1, 1]} : vector<18x18xf32> to vector<16x16xf32>
    %102 = vector.broadcast %100 : f32 to vector<16x16xf32>
    %103 = arith.mulf %102, %101 : vector<16x16xf32>
    %104 = arith.addf %95, %103 : vector<16x16xf32>
    %c9_i32_36 = arith.constant 9 : i32
    %105 = arith.muli %92, %c9_i32_36 : i32
    %c0_i32_37 = arith.constant 0 : i32
    %106 = arith.addi %105, %c0_i32_37 : i32
    %c1_i32_38 = arith.constant 1 : i32
    %107 = arith.addi %106, %c1_i32_38 : i32
    %108 = arith.index_cast %107 : i32 to index
    %109 = memref.load %arg2[%108] : memref<72xf32, #tpu.memory_space<smem>>
    %110 = vector.extract_strided_slice %1 {offsets = [0, 1], sizes = [16, 16], strides = [1, 1]} : vector<18x18xf32> to vector<16x16xf32>
    %111 = vector.broadcast %109 : f32 to vector<16x16xf32>
    %112 = arith.mulf %111, %110 : vector<16x16xf32>
    %113 = arith.addf %104, %112 : vector<16x16xf32>
    %c9_i32_39 = arith.constant 9 : i32
    %114 = arith.muli %92, %c9_i32_39 : i32
    %c0_i32_40 = arith.constant 0 : i32
    %115 = arith.addi %114, %c0_i32_40 : i32
    %c2_i32_41 = arith.constant 2 : i32
    %116 = arith.addi %115, %c2_i32_41 : i32
    %117 = arith.index_cast %116 : i32 to index
    %118 = memref.load %arg2[%117] : memref<72xf32, #tpu.memory_space<smem>>
    %119 = vector.extract_strided_slice %1 {offsets = [0, 2], sizes = [16, 16], strides = [1, 1]} : vector<18x18xf32> to vector<16x16xf32>
    %120 = vector.broadcast %118 : f32 to vector<16x16xf32>
    %121 = arith.mulf %120, %119 : vector<16x16xf32>
    %122 = arith.addf %113, %121 : vector<16x16xf32>
    %c9_i32_42 = arith.constant 9 : i32
    %123 = arith.muli %92, %c9_i32_42 : i32
    %c3_i32_43 = arith.constant 3 : i32
    %124 = arith.addi %123, %c3_i32_43 : i32
    %c0_i32_44 = arith.constant 0 : i32
    %125 = arith.addi %124, %c0_i32_44 : i32
    %126 = arith.index_cast %125 : i32 to index
    %127 = memref.load %arg2[%126] : memref<72xf32, #tpu.memory_space<smem>>
    %128 = vector.extract_strided_slice %1 {offsets = [1, 0], sizes = [16, 16], strides = [1, 1]} : vector<18x18xf32> to vector<16x16xf32>
    %129 = vector.broadcast %127 : f32 to vector<16x16xf32>
    %130 = arith.mulf %129, %128 : vector<16x16xf32>
    %131 = arith.addf %122, %130 : vector<16x16xf32>
    %c9_i32_45 = arith.constant 9 : i32
    %132 = arith.muli %92, %c9_i32_45 : i32
    %c3_i32_46 = arith.constant 3 : i32
    %133 = arith.addi %132, %c3_i32_46 : i32
    %c1_i32_47 = arith.constant 1 : i32
    %134 = arith.addi %133, %c1_i32_47 : i32
    %135 = arith.index_cast %134 : i32 to index
    %136 = memref.load %arg2[%135] : memref<72xf32, #tpu.memory_space<smem>>
    %137 = vector.extract_strided_slice %1 {offsets = [1, 1], sizes = [16, 16], strides = [1, 1]} : vector<18x18xf32> to vector<16x16xf32>
    %138 = vector.broadcast %136 : f32 to vector<16x16xf32>
    %139 = arith.mulf %138, %137 : vector<16x16xf32>
    %140 = arith.addf %131, %139 : vector<16x16xf32>
    %c9_i32_48 = arith.constant 9 : i32
    %141 = arith.muli %92, %c9_i32_48 : i32
    %c3_i32_49 = arith.constant 3 : i32
    %142 = arith.addi %141, %c3_i32_49 : i32
    %c2_i32_50 = arith.constant 2 : i32
    %143 = arith.addi %142, %c2_i32_50 : i32
    %144 = arith.index_cast %143 : i32 to index
    %145 = memref.load %arg2[%144] : memref<72xf32, #tpu.memory_space<smem>>
    %146 = vector.extract_strided_slice %1 {offsets = [1, 2], sizes = [16, 16], strides = [1, 1]} : vector<18x18xf32> to vector<16x16xf32>
    %147 = vector.broadcast %145 : f32 to vector<16x16xf32>
    %148 = arith.mulf %147, %146 : vector<16x16xf32>
    %149 = arith.addf %140, %148 : vector<16x16xf32>
    %c9_i32_51 = arith.constant 9 : i32
    %150 = arith.muli %92, %c9_i32_51 : i32
    %c6_i32_52 = arith.constant 6 : i32
    %151 = arith.addi %150, %c6_i32_52 : i32
    %c0_i32_53 = arith.constant 0 : i32
    %152 = arith.addi %151, %c0_i32_53 : i32
    %153 = arith.index_cast %152 : i32 to index
    %154 = memref.load %arg2[%153] : memref<72xf32, #tpu.memory_space<smem>>
    %155 = vector.extract_strided_slice %1 {offsets = [2, 0], sizes = [16, 16], strides = [1, 1]} : vector<18x18xf32> to vector<16x16xf32>
    %156 = vector.broadcast %154 : f32 to vector<16x16xf32>
    %157 = arith.mulf %156, %155 : vector<16x16xf32>
    %158 = arith.addf %149, %157 : vector<16x16xf32>
    %c9_i32_54 = arith.constant 9 : i32
    %159 = arith.muli %92, %c9_i32_54 : i32
    %c6_i32_55 = arith.constant 6 : i32
    %160 = arith.addi %159, %c6_i32_55 : i32
    %c1_i32_56 = arith.constant 1 : i32
    %161 = arith.addi %160, %c1_i32_56 : i32
    %162 = arith.index_cast %161 : i32 to index
    %163 = memref.load %arg2[%162] : memref<72xf32, #tpu.memory_space<smem>>
    %164 = vector.extract_strided_slice %1 {offsets = [2, 1], sizes = [16, 16], strides = [1, 1]} : vector<18x18xf32> to vector<16x16xf32>
    %165 = vector.broadcast %163 : f32 to vector<16x16xf32>
    %166 = arith.mulf %165, %164 : vector<16x16xf32>
    %167 = arith.addf %158, %166 : vector<16x16xf32>
    %c9_i32_57 = arith.constant 9 : i32
    %168 = arith.muli %92, %c9_i32_57 : i32
    %c6_i32_58 = arith.constant 6 : i32
    %169 = arith.addi %168, %c6_i32_58 : i32
    %c2_i32_59 = arith.constant 2 : i32
    %170 = arith.addi %169, %c2_i32_59 : i32
    %171 = arith.index_cast %170 : i32 to index
    %172 = memref.load %arg2[%171] : memref<72xf32, #tpu.memory_space<smem>>
    %173 = vector.extract_strided_slice %1 {offsets = [2, 2], sizes = [16, 16], strides = [1, 1]} : vector<18x18xf32> to vector<16x16xf32>
    %174 = vector.broadcast %172 : f32 to vector<16x16xf32>
    %175 = arith.mulf %174, %173 : vector<16x16xf32>
    %176 = arith.addf %167, %175 : vector<16x16xf32>
    %c0_60 = arith.constant 0 : index
    %c0_61 = arith.constant 0 : index
    %c1 = arith.constant 1 : index
    %c0_62 = arith.constant 0 : index
    %c0_63 = arith.constant 0 : index
    %177 = vector.load %arg5[%c0_60, %c0_61, %c1, %c0_62, %c0_63] : memref<1x1x2x16x16xf32, #tpu.memory_space<vmem>>, vector<1x1x1x16x16xf32>
    %178 = vector.shape_cast %177 : vector<1x1x1x16x16xf32> to vector<16x16xf32>
    %179 = vector.shape_cast %176 : vector<16x16xf32> to vector<1x1x1x16x16xf32>
    tpu.vector_store %arg5[%c0_60, %c0_61, %c1, %c0_62, %c0_63], %179 {strides = array<i32>} : memref<1x1x2x16x16xf32, #tpu.memory_space<vmem>>, vector<1x1x1x16x16xf32>,
    return
  }
  func.func @transform_0(%arg0: i32, %arg1: i32) -> i32 {
    %c0_i32 = arith.constant 0 : i32
    %c0_i32_0 = arith.constant 0 : i32
    return %c0_i32 : i32
  }
  func.func @transform_1(%arg0: i32, %arg1: i32) -> i32 {
    %c0_i32 = arith.constant 0 : i32
    %c0_i32_0 = arith.constant 0 : i32
    return %c0_i32 : i32
  }
  func.func @transform_2(%arg0: i32, %arg1: i32) -> (i32, i32, i32, i32) {
    %c0_i32 = arith.constant 0 : i32
    %c0_i32_0 = arith.constant 0 : i32
    %c0_i32_1 = arith.constant 0 : i32
    return %arg0, %arg1, %c0_i32, %c0_i32_0 : i32, i32, i32, i32
  }
  func.func @transform_3(%arg0: i32, %arg1: i32) -> (i32, i32, i32, i32, i32) {
    %c0_i32 = arith.constant 0 : i32
    %c0_i32_0 = arith.constant 0 : i32
    %c0_i32_1 = arith.constant 0 : i32
    %c0_i32_2 = arith.constant 0 : i32
    return %arg0, %arg1, %c0_i32, %c0_i32_0, %c0_i32_1 : i32, i32, i32, i32, i32
  }
}

</mosaic_0001>

<llo_original>
// kernel: tpu_custom_call.1
$region0: #{tpu_custom_call.1}
  #allocation0 [shape = 'u32[]', space=smem, size = 0x4, offset = 0x4, fixed_abs, tag = 'smem constant byte address 0x4 - core index']
  #allocation1 [shape = 'u32[72,128]{1,0:T(1,128)}', space=vmem, size = 0x9000, scoped, tag = 'internal scratch']
  %s0 = inlined_call_operand.vmem [shape: f32[72], index: 0, kind: input, shape index: {}]
  %s1 = inlined_call_operand.vmem [shape: f32[8], index: 1, kind: input, shape index: {}]
  %s2 = inlined_call_operand.vmem [shape: f32[2,4,18,18], index: 2, kind: input, shape index: {}]
  %s3 = inlined_call_operand.hbm [shape: f32[2,4,2,16,16], index: 3, kind: output, shape index: {}]
  %s4 = sld [smem:[#allocation0]]
  $region53: #{tpu_custom_call.1} parent=0
    _
  %s6 = ssub.s32 1, %s4
  %s7 = scalar_select 0, %s6, %s4
  $region1: #{tpu_custom_call.1} parent=0
    #allocation2 [shape = 'u8[512]{0}', space=smem, size = 0x200, scoped, tag = 'input window, operand 0, single buffered']
    #allocation3 [shape = 's32[2]{0}', space=sflag, size = 0x8, scoped, tag = 'scoped memory for tpu_custom_call.1']
    #allocation4 [shape = 's32[2]{0}', space=sflag, size = 0x8, scoped, tag = 'scoped memory for tpu_custom_call.1']
    #allocation5 [shape = 'u8[512]{0}', space=smem, size = 0x200, scoped, tag = 'input window, operand 1, single buffered']
    #allocation6 [shape = 's32[1]{0}', space=sflag, size = 0x4, scoped, tag = 'scoped memory for tpu_custom_call.1']
    #allocation7 [shape = 'u8[32768]{0}', space=vmem, size = 0x8000, scoped, tag = 'output window, operand 0']
    %8 = vsyncpa [#allocation4], 0
    %9 = vsyncpa [#allocation6], 0
    %10 = vsyncpa [#allocation3], 0
    %s11 = scalar_lea.sflag [#allocation3], 1
    %12 = vsyncpa %s11, 0
    loop: start=0, step=1, limit=10
    $region2: #{tpu_custom_call.1} parent=1 // loop_pre_header
      _
    $region3: #{tpu_custom_call.1} parent=1 // loop_header
      %s14 = sphi 0, %s18
      %p15 = scmp.ge.s32.totalorder %s14, 10
      %s21 = sphi 0, %s33
      %s22 = sphi 0, %s29
      %s23 = sphi 0, %s21
      %s24 = sphi 0, %s22
      %s25 = sphi 0, %s23
      %s26 = sphi 0, %s24
      %s34 = sphi 0, %s34
      %s36 = sphi 0, %s34
      %s37 = sphi 0, %s36
      %s51 = sphi 0, %s37
      %s55 = sphi 0, %s55
      %s57 = sphi 0, %s55
      %s58 = sphi 0, %s57
      %s72 = sphi 0, %s58
      %s80 = sphi 0, %s82
      %s83 = sphi 0, %s80
      %s84 = sphi 0, %s83
      %s100 = sphi 0, %s84
      %s108 = sphi 0, %s110
      %s111 = sphi 0, %s108
      %s112 = sphi 0, %s111
      %s128 = sphi 0, %s112
    $region4: #{tpu_custom_call.1} parent=1 // loop_header_branch
      %17 = sbr.rel (%p15) target = $region8
    $region5: #{tpu_custom_call.1} parent=1 // loop_body
      %s19 = ssub.s32 %s14, 1
      %s20 = ssub.s32 %s14, 2
      %s27 = sadd.s32 1, %s22
      %p28 = scmp.ge.s32.totalorder %s27, 4
      %s29 = scalar_select %p28, 0, %s27
      %s30 = sadd.s32 1, %s21
      %s31 = scalar_select %p28, %s30, %s21
      %p32 = scmp.ge.s32.totalorder %s31, 2
      %s33 = scalar_select %p32, 0, %s31
      %s35 = sadd.s32 %s34, 1
      %p38 = scmp.eq.s32.totalorder %s14, 7
      %p39 = scmp.ne.s32.totalorder %s34, %s36
      %p40 = scmp.eq.s32.totalorder %s14, 0
      %p41 = por %p39, %p40
      %p42 = scmp.ne.s32.totalorder %s34, %s36
      %p43 = scmp.eq.s32.totalorder %s19, 7
      %p44 = por %p42, %p43
      %p45 = scmp.ne.s32.totalorder %s36, %s37
      %p46 = scmp.eq.s32.totalorder %s19, 0
      %p47 = por %p45, %p46
      %p48 = scmp.ne.s32.totalorder %s36, %s37
      %p49 = scmp.eq.s32.totalorder %s20, 7
      %p50 = por %p48, %p49
      %p52 = scmp.ne.s32.totalorder %s37, %s51
      %p53 = scmp.eq.s32.totalorder %s20, 0
      %p54 = por %p52, %p53
      %s56 = sadd.s32 %s55, 1
      %p59 = scmp.eq.s32.totalorder %s14, 7
      %p60 = scmp.ne.s32.totalorder %s55, %s57
      %p61 = scmp.eq.s32.totalorder %s14, 0
      %p62 = por %p60, %p61
      %p63 = scmp.ne.s32.totalorder %s55, %s57
      %p64 = scmp.eq.s32.totalorder %s19, 7
      %p65 = por %p63, %p64
      %p66 = scmp.ne.s32.totalorder %s57, %s58
      %p67 = scmp.eq.s32.totalorder %s19, 0
      %p68 = por %p66, %p67
      %p69 = scmp.ne.s32.totalorder %s57, %s58
      %p70 = scmp.eq.s32.totalorder %s20, 7
      %p71 = por %p69, %p70
      %p73 = scmp.ne.s32.totalorder %s58, %s72
      %p74 = scmp.eq.s32.totalorder %s20, 0
      %p75 = por %p73, %p74
      %s76 = ssub.s32 %s21, %s33
      %s77 = ssub.s32 %s22, %s29
      %s78 = sor.u32 %s76, %s77
      %p79 = scmp.eq.s32.totalorder %s78, 0
      %s81 = sadd.s32 %s80, 1
      %s82 = scalar_select %p79, %s80, %s81
      %p85 = pneg %p79
      %p86 = scmp.eq.s32.totalorder %s14, 7
      %p87 = por %p85, %p86
      %p88 = scmp.ne.s32.totalorder %s80, %s83
      %p89 = scmp.eq.s32.totalorder %s14, 0
      %p90 = por %p88, %p89
      %p91 = scmp.ne.s32.totalorder %s80, %s83
      %p92 = scmp.eq.s32.totalorder %s19, 7
      %p93 = por %p91, %p92
      %p94 = scmp.ne.s32.totalorder %s83, %s84
      %p95 = scmp.eq.s32.totalorder %s19, 0
      %p96 = por %p94, %p95
      %p97 = scmp.ne.s32.totalorder %s83, %s84
      %p98 = scmp.eq.s32.totalorder %s20, 7
      %p99 = por %p97, %p98
      %p101 = scmp.ne.s32.totalorder %s84, %s100
      %p102 = scmp.eq.s32.totalorder %s20, 0
      %p103 = por %p101, %p102
      %s104 = ssub.s32 %s21, %s33
      %s105 = ssub.s32 %s22, %s29
      %s106 = sor.u32 %s104, %s105
      %p107 = scmp.eq.s32.totalorder %s106, 0
      %s109 = sadd.s32 %s108, 1
      %s110 = scalar_select %p107, %s108, %s109
      %p113 = pneg %p107
      %p114 = scmp.eq.s32.totalorder %s14, 7
      %p115 = por %p113, %p114
      %p116 = scmp.ne.s32.totalorder %s108, %s111
      %p117 = scmp.eq.s32.totalorder %s14, 0
      %p118 = por %p116, %p117
      %p119 = scmp.ne.s32.totalorder %s108, %s111
      %p120 = scmp.eq.s32.totalorder %s19, 7
      %p121 = por %p119, %p120
      %p122 = scmp.ne.s32.totalorder %s111, %s112
      %p123 = scmp.eq.s32.totalorder %s19, 0
      %p124 = por %p122, %p123
      %p125 = scmp.ne.s32.totalorder %s111, %s112
      %p126 = scmp.eq.s32.totalorder %s20, 7
      %p127 = por %p125, %p126
      %p129 = scmp.ne.s32.totalorder %s112, %s128
      %p130 = scmp.eq.s32.totalorder %s20, 0
      %p131 = por %p129, %p130
      %p132 = scmp.le.s32.totalorder 1, %s14
      %p133 = scmp.lt.s32.totalorder %s14, 9
      %p134 = pnand %p132, %p133
      %p135 = pneg %p134
      // Predicated region
      $region9: #{tpu_custom_call.1} parent=5 // pred_check
        _
      $region10: #{tpu_custom_call.1} parent=5 // pred_check_branch
        %137 = sbr.rel (%p134) target = $region12
      $region11: #{tpu_custom_call.1} parent=5 // pred_region
        %s138 = ssub.s32 %s14, 1
        // Predicated region
        $region13: #{tpu_custom_call.1} parent=11 // pred_check
          %p139 = pneg %p47
        $region14: #{tpu_custom_call.1} parent=11 // pred_check_branch
          %141 = sbr.rel (%p139) target = $region16
        $region15: #{tpu_custom_call.1} parent=11 // pred_region
          %143 = vsyncadd [#allocation4], 0
          %s145 = sshll.u32 %s0, 4
          %s146 = int_to_ptr.vmem [resolvable:$true] %s145
          %148 = dma.vmem_to_smem %s146, 16, [#allocation2], [#allocation4]
        $region16: #{tpu_custom_call.1} parent=11 // pred_fallthru
          _
        // Predicated region
        $region17: #{tpu_custom_call.1} parent=11 // pred_check
          %p149 = pneg %p68
        $region18: #{tpu_custom_call.1} parent=11 // pred_check_branch
          %151 = sbr.rel (%p149) target = $region20
        $region19: #{tpu_custom_call.1} parent=11 // pred_region
          %153 = vsyncadd [#allocation6], 0
          %s155 = sshll.u32 %s1, 4
          %s156 = int_to_ptr.vmem [resolvable:$true] %s155
          %158 = dma.vmem_to_smem %s156, 16, [#allocation5], [#allocation6]
        $region20: #{tpu_custom_call.1} parent=11 // pred_fallthru
          _
      $region12: #{tpu_custom_call.1} parent=5 // pred_fallthru
        _
      %p159 = scmp.lt.s32.totalorder %s14, 8
      // Predicated region
      $region21: #{tpu_custom_call.1} parent=5 // pred_check
        %p160 = pneg %p159
      $region22: #{tpu_custom_call.1} parent=5 // pred_check_branch
        %162 = sbr.rel (%p160) target = $region24
      $region23: #{tpu_custom_call.1} parent=5 // pred_region
        // Predicated region
        $region25: #{tpu_custom_call.1} parent=23 // pred_check
          %p163 = pneg %p90
        $region26: #{tpu_custom_call.1} parent=23 // pred_check_branch
          %165 = sbr.rel (%p163) target = $region28
        $region27: #{tpu_custom_call.1} parent=23 // pred_region
          %p166 = scmp.lt.s32.totalorder %s21, 1
          %s167 = scalar_select %p166, %s21, 1
          %p168 = scmp.lt.s32.totalorder %s22, 3
          %s169 = scalar_select %p168, %s22, 3
          %s170 = smul.addr %s169, 3
          %s171 = smul.addr %s167, 12
          %s172 = sadd.s32 %s170, %s171
          %s173 = smul.addr %s172, 8
          %s174 = scalar_lea.vmem %s2, %s173
        $region28: #{tpu_custom_call.1} parent=23 // pred_fallthru
          _
      $region24: #{tpu_custom_call.1} parent=5 // pred_fallthru
        _
      %p175 = scmp.le.s32.totalorder 1, %s14
      %p176 = scmp.lt.s32.totalorder %s14, 9
      %p177 = pnand %p175, %p176
      %p178 = pneg %p177
      // Predicated region
      $region29: #{tpu_custom_call.1} parent=5 // pred_check
        _
      $region30: #{tpu_custom_call.1} parent=5 // pred_check_branch
        %180 = sbr.rel (%p177) target = $region32
      $region31: #{tpu_custom_call.1} parent=5 // pred_region
        %s181 = ssub.s32 %s14, 1
        // Predicated region
        $region33: #{tpu_custom_call.1} parent=31 // pred_check
          %p182 = pneg %p47
        $region34: #{tpu_custom_call.1} parent=31 // pred_check_branch
          %184 = sbr.rel (%p182) target = $region36
        $region35: #{tpu_custom_call.1} parent=31 // pred_region
          %186 = dma.done [#allocation4], 16
        $region36: #{tpu_custom_call.1} parent=31 // pred_fallthru
          _
        // Predicated region
        $region37: #{tpu_custom_call.1} parent=31 // pred_check
          %p187 = pneg %p68
        $region38: #{tpu_custom_call.1} parent=31 // pred_check_branch
          %189 = sbr.rel (%p187) target = $region40
        $region39: #{tpu_custom_call.1} parent=31 // pred_region
          %191 = dma.done [#allocation6], 16
        $region40: #{tpu_custom_call.1} parent=31 // pred_fallthru
          _
        %192 = sfence
        %p193 = pneg %p47
        %p194 = pneg %p44
        %p195 = pneg %p68
        %p196 = pneg %p65
        %p197 = scmp.lt.s32.totalorder %s23, 1
        %s198 = scalar_select %p197, %s23, 1
        %p199 = scmp.lt.s32.totalorder %s24, 3
        %s200 = scalar_select %p199, %s24, 3
        %s201 = smul.addr %s200, 3
        %s202 = smul.addr %s198, 12
        %s203 = sadd.s32 %s201, %s202
        %s204 = smul.addr %s203, 8
        %s205 = scalar_lea.vmem %s2, %s204
        %p206 = pneg %p96
        %p207 = pneg %p93
        %p208 = pneg %p124
        %p209 = pneg %p121
        %s210 = sand.u32 %s111, 1
        %s211 = scalar_lea.sflag [#allocation3], %s210
        %s212 = sand.u32 %s111, 1
        %s213 = smul.addr %s212, 32
        %s214 = scalar_lea.vmem [#allocation7], %s213
        %p215 = scmp.lt.s32.totalorder %s23, 1
        %s216 = scalar_select %p215, %s23, 1
        %p217 = scmp.lt.s32.totalorder %s24, 3
        %s218 = scalar_select %p217, %s24, 3
        %s219 = smul.addr %s218, 3
        %s220 = smul.addr %s216, 12
        %s221 = sadd.s32 %s219, %s220
        %s222 = smul.addr %s221, 8
        %s223 = scalar_lea.vmem %s2, %s222
        %v224 = vld [vmem:[%s223] sm:$0xff]
        %v225 = vld [vmem:[%s223 + $0x8] sm:$0xff]
        %v226 = vld [vmem:[%s223 + $0x10] sm:$0x3]
        %s227 = smul.u32 %s24, 2
        %s228 = sld [smem:[#allocation5 + %s227]]
        %v229 = vstv %s228
        %s230 = smul.u32 %s24, 18
        %s231 = sld [smem:[#allocation2 + %s230]]
        %v232 = vstv %s231
        %v233 = vmul.f32 %v232, %v224
        %v234 = vmul.f32 %v232, %v225
        %v235 = vadd.f32 %v229, %v233
        %v236 = vadd.f32 %v229, %v234
        %s237 = sadd.s32 %s230, 1
        %s238 = sld [smem:[#allocation2 + %s237]]
        %v239 = vstv %s238
        %v240 = vmul.f32 %v239, %v224
        %v241 = vmul.f32 %v239, %v225
        %244 = vrot.lane.b32.xlu0 %v240, 127
        %v245 = vpop.permute.xlu0 %244
        %246 = vrot.lane.b32.xlu0 %v241, 127
        %v247 = vpop.permute.xlu0 %246
        %v250 = vadd.f32 %v235, %v245
        %v251 = vadd.f32 %v236, %v247
        %s252 = sadd.s32 %s230, 2
        %s253 = sld [smem:[#allocation2 + %s252]]
        %v254 = vstv %s253
        %v255 = vmul.f32 %v254, %v224
        %v256 = vmul.f32 %v254, %v225
        %259 = vrot.lane.b32.xlu0 %v255, 126
        %v260 = vpop.permute.xlu0 %259
        %261 = vrot.lane.b32.xlu0 %v256, 126
        %v262 = vpop.permute.xlu0 %261
        %v265 = vadd.f32 %v250, %v260
        %v266 = vadd.f32 %v251, %v262
        %s267 = sadd.s32 %s230, 3
        %s268 = sld [smem:[#allocation2 + %s267]]
        %v269 = vstv %s268
        %v270 = vmul.f32 %v269, %v224
        %v271 = vmul.f32 %v269, %v225
        %v272 = vmul.f32 %v269, %v226
        %vm276 = vcmask 1046528
        %v277 = vrot.slane %v270, 1
        %v278 = vrot.slane %v271, 1
        %v279 = vsel %vm276, %v277, %v278
        %v280 = vrot.slane %v272, 1
        %v281 = vsel %vm276, %v278, %v280
        %v284 = vadd.f32 %v265, %v279
        %v285 = vadd.f32 %v266, %v281
        %s286 = sadd.s32 %s230, 4
        %s287 = sld [smem:[#allocation2 + %s286]]
        %v288 = vstv %s287
        %v289 = vmul.f32 %v288, %v224
        %v290 = vmul.f32 %v288, %v225
        %v291 = vmul.f32 %v288, %v226
        %v295 = vrot.slane %v289, 1
        %v296 = vrot.slane %v290, 1
        %v297 = vsel %vm276, %v295, %v296
        %v298 = vrot.slane %v291, 1
        %v299 = vsel %vm276, %v296, %v298
        %300 = vrot.lane.b32.xlu0 %v297, 127
        %v301 = vpop.permute.xlu0 %300
        %302 = vrot.lane.b32.xlu0 %v299, 127
        %v303 = vpop.permute.xlu0 %302
        %v306 = vadd.f32 %v284, %v301
        %v307 = vadd.f32 %v285, %v303
        %s308 = sadd.s32 %s230, 5
        %s309 = sld [smem:[#allocation2 + %s308]]
        %v310 = vstv %s309
        %v311 = vmul.f32 %v310, %v224
        %v312 = vmul.f32 %v310, %v225
        %v313 = vmul.f32 %v310, %v226
        %v317 = vrot.slane %v311, 1
        %v318 = vrot.slane %v312, 1
        %v319 = vsel %vm276, %v317, %v318
        %v320 = vrot.slane %v313, 1
        %v321 = vsel %vm276, %v318, %v320
        %322 = vrot.lane.b32.xlu0 %v319, 126
        %v323 = vpop.permute.xlu0 %322
        %324 = vrot.lane.b32.xlu0 %v321, 126
        %v325 = vpop.permute.xlu0 %324
        %v328 = vadd.f32 %v306, %v323
        %v329 = vadd.f32 %v307, %v325
        %s330 = sadd.s32 %s230, 6
        %s331 = sld [smem:[#allocation2 + %s330]]
        %v332 = vstv %s331
        %v333 = vmul.f32 %v332, %v224
        %v334 = vmul.f32 %v332, %v225
        %v335 = vmul.f32 %v332, %v226
        %vm339 = vcmask 1045504
        %v340 = vrot.slane %v333, 2
        %v341 = vrot.slane %v334, 2
        %v342 = vsel %vm339, %v340, %v341
        %v343 = vrot.slane %v335, 2
        %v344 = vsel %vm339, %v341, %v343
        %v347 = vadd.f32 %v328, %v342
        %v348 = vadd.f32 %v329, %v344
        %s349 = sadd.s32 %s230, 7
        %s350 = sld [smem:[#allocation2 + %s349]]
        %v351 = vstv %s350
        %v352 = vmul.f32 %v351, %v224
        %v353 = vmul.f32 %v351, %v225
        %v354 = vmul.f32 %v351, %v226
        %v358 = vrot.slane %v352, 2
        %v359 = vrot.slane %v353, 2
        %v360 = vsel %vm339, %v358, %v359
        %v361 = vrot.slane %v354, 2
        %v362 = vsel %vm339, %v359, %v361
        %363 = vrot.lane.b32.xlu0 %v360, 127
        %v364 = vpop.permute.xlu0 %363
        %365 = vrot.lane.b32.xlu0 %v362, 127
        %v366 = vpop.permute.xlu0 %365
        %v369 = vadd.f32 %v347, %v364
        %v370 = vadd.f32 %v348, %v366
        %s371 = sadd.s32 %s230, 8
        %s372 = sld [smem:[#allocation2 + %s371]]
        %v373 = vstv %s372
        %v374 = vmul.f32 %v373, %v224
        %v375 = vmul.f32 %v373, %v225
        %v376 = vmul.f32 %v373, %v226
        %v380 = vrot.slane %v374, 2
        %v381 = vrot.slane %v375, 2
        %v382 = vsel %vm339, %v380, %v381
        %v383 = vrot.slane %v376, 2
        %v384 = vsel %vm339, %v381, %v383
        %385 = vrot.lane.b32.xlu0 %v382, 126
        %v386 = vpop.permute.xlu0 %385
        %387 = vrot.lane.b32.xlu0 %v384, 126
        %v388 = vpop.permute.xlu0 %387
        %v391 = vadd.f32 %v369, %v386
        %v392 = vadd.f32 %v370, %v388
        %vm393 = vcmask 130048
        %394 = vst.msk [vmem:[%s214] sm:$0xff] %vm393, %v391
        %395 = vst.msk [vmem:[%s214 + $0x8] sm:$0xff] %vm393, %v392
        %s396 = sadd.s32 %s227, 1
        %s397 = sld [smem:[#allocation5 + %s396]]
        %v398 = vstv %s397
        %s399 = smul.u32 %s396, 9
        %s400 = sld [smem:[#allocation2 + %s399]]
        %v401 = vstv %s400
        %v402 = vmul.f32 %v401, %v224
        %v403 = vmul.f32 %v401, %v225
        %v404 = vadd.f32 %v398, %v402
        %v405 = vadd.f32 %v398, %v403
        %s406 = sadd.s32 %s399, 1
        %s407 = sld [smem:[#allocation2 + %s406]]
        %v408 = vstv %s407
        %v409 = vmul.f32 %v408, %v224
        %v410 = vmul.f32 %v408, %v225
        %413 = vrot.lane.b32.xlu0 %v409, 127
        %v414 = vpop.permute.xlu0 %413
        %415 = vrot.lane.b32.xlu0 %v410, 127
        %v416 = vpop.permute.xlu0 %415
        %v419 = vadd.f32 %v404, %v414
        %v420 = vadd.f32 %v405, %v416
        %s421 = sadd.s32 %s399, 2
        %s422 = sld [smem:[#allocation2 + %s421]]
        %v423 = vstv %s422
        %v424 = vmul.f32 %v423, %v224
        %v425 = vmul.f32 %v423, %v225
        %428 = vrot.lane.b32.xlu0 %v424, 126
        %v429 = vpop.permute.xlu0 %428
        %430 = vrot.lane.b32.xlu0 %v425, 126
        %v431 = vpop.permute.xlu0 %430
        %v434 = vadd.f32 %v419, %v429
        %v435 = vadd.f32 %v420, %v431
        %s436 = sadd.s32 %s399, 3
        %s437 = sld [smem:[#allocation2 + %s436]]
        %v438 = vstv %s437
        %v439 = vmul.f32 %v438, %v224
        %v440 = vmul.f32 %v438, %v225
        %v441 = vmul.f32 %v438, %v226
        %v445 = vrot.slane %v439, 1
        %v446 = vrot.slane %v440, 1
        %v447 = vsel %vm276, %v445, %v446
        %v448 = vrot.slane %v441, 1
        %v449 = vsel %vm276, %v446, %v448
        %v452 = vadd.f32 %v434, %v447
        %v453 = vadd.f32 %v435, %v449
        %s454 = sadd.s32 %s399, 4
        %s455 = sld [smem:[#allocation2 + %s454]]
        %v456 = vstv %s455
        %v457 = vmul.f32 %v456, %v224
        %v458 = vmul.f32 %v456, %v225
        %v459 = vmul.f32 %v456, %v226
        %v463 = vrot.slane %v457, 1
        %v464 = vrot.slane %v458, 1
        %v465 = vsel %vm276, %v463, %v464
        %v466 = vrot.slane %v459, 1
        %v467 = vsel %vm276, %v464, %v466
        %468 = vrot.lane.b32.xlu0 %v465, 127
        %v469 = vpop.permute.xlu0 %468
        %470 = vrot.lane.b32.xlu0 %v467, 127
        %v471 = vpop.permute.xlu0 %470
        %v474 = vadd.f32 %v452, %v469
        %v475 = vadd.f32 %v453, %v471
        %s476 = sadd.s32 %s399, 5
        %s477 = sld [smem:[#allocation2 + %s476]]
        %v478 = vstv %s477
        %v479 = vmul.f32 %v478, %v224
        %v480 = vmul.f32 %v478, %v225
        %v481 = vmul.f32 %v478, %v226
        %v485 = vrot.slane %v479, 1
        %v486 = vrot.slane %v480, 1
        %v487 = vsel %vm276, %v485, %v486
        %v488 = vrot.slane %v481, 1
        %v489 = vsel %vm276, %v486, %v488
        %490 = vrot.lane.b32.xlu0 %v487, 126
        %v491 = vpop.permute.xlu0 %490
        %492 = vrot.lane.b32.xlu0 %v489, 126
        %v493 = vpop.permute.xlu0 %492
        %v496 = vadd.f32 %v474, %v491
        %v497 = vadd.f32 %v475, %v493
        %s498 = sadd.s32 %s399, 6
        %s499 = sld [smem:[#allocation2 + %s498]]
        %v500 = vstv %s499
        %v501 = vmul.f32 %v500, %v224
        %v502 = vmul.f32 %v500, %v225
        %v503 = vmul.f32 %v500, %v226
        %v507 = vrot.slane %v501, 2
        %v508 = vrot.slane %v502, 2
        %v509 = vsel %vm339, %v507, %v508
        %v510 = vrot.slane %v503, 2
        %v511 = vsel %vm339, %v508, %v510
        %v514 = vadd.f32 %v496, %v509
        %v515 = vadd.f32 %v497, %v511
        %s516 = sadd.s32 %s399, 7
        %s517 = sld [smem:[#allocation2 + %s516]]
        %v518 = vstv %s517
        %v519 = vmul.f32 %v518, %v224
        %v520 = vmul.f32 %v518, %v225
        %v521 = vmul.f32 %v518, %v226
        %v525 = vrot.slane %v519, 2
        %v526 = vrot.slane %v520, 2
        %v527 = vsel %vm339, %v525, %v526
        %v528 = vrot.slane %v521, 2
        %v529 = vsel %vm339, %v526, %v528
        %530 = vrot.lane.b32.xlu0 %v527, 127
        %v531 = vpop.permute.xlu0 %530
        %532 = vrot.lane.b32.xlu0 %v529, 127
        %v533 = vpop.permute.xlu0 %532
        %v536 = vadd.f32 %v514, %v531
        %v537 = vadd.f32 %v515, %v533
        %s538 = sadd.s32 %s399, 8
        %s539 = sld [smem:[#allocation2 + %s538]]
        %v540 = vstv %s539
        %v541 = vmul.f32 %v540, %v224
        %v542 = vmul.f32 %v540, %v225
        %v543 = vmul.f32 %v540, %v226
        %v547 = vrot.slane %v541, 2
        %v548 = vrot.slane %v542, 2
        %v549 = vsel %vm339, %v547, %v548
        %v550 = vrot.slane %v543, 2
        %v551 = vsel %vm339, %v548, %v550
        %552 = vrot.lane.b32.xlu0 %v549, 126
        %v553 = vpop.permute.xlu0 %552
        %554 = vrot.lane.b32.xlu0 %v551, 126
        %v555 = vpop.permute.xlu0 %554
        %v558 = vadd.f32 %v536, %v553
        %v559 = vadd.f32 %v537, %v555
        %s560 = scalar_lea.vmem %s214, 16 [#allocation7]
        %561 = vst.msk [vmem:[%s560] sm:$0xff] %vm393, %v558
        %562 = vst.msk [vmem:[%s560 + $0x8] sm:$0xff] %vm393, %v559
        %s563 = sand.u32 %s111, 1
        %s564 = scalar_lea.sflag [#allocation3], %s563
        %s565 = sand.u32 %s111, 1
        %s566 = smul.addr %s565, 32
        %s567 = scalar_lea.vmem [#allocation7], %s566
        // Predicated region
        $region41: #{tpu_custom_call.1} parent=31 // pred_check
          %p568 = pneg %p121
        $region42: #{tpu_custom_call.1} parent=31 // pred_check_branch
          %570 = sbr.rel (%p568) target = $region44
        $region43: #{tpu_custom_call.1} parent=31 // pred_region
          %572 = vsyncadd %s564, 0
          %s573 = smul.addr %s24, 4
          %s574 = smul.addr %s23, 16
          %s575 = sadd.s32 %s573, %s574
          %s576 = smul.addr %s575, 8
          %s577 = scalar_lea.hbm %s3, %s576
          %s578 = sshll.u32 %s567, 4
          %s579 = int_to_ptr.vmem [resolvable:$true] %s578
          %s580 = sshll.u32 %s577, 4
          %s581 = int_to_ptr.hbm [resolvable:$true] %s580
          %586 = dma.vmem_to_hbm [thread:$0]  %s579, 512, %s581, %s564, 128, 128, 8
        $region44: #{tpu_custom_call.1} parent=31 // pred_fallthru
          _
      $region32: #{tpu_custom_call.1} parent=5 // pred_fallthru
        _
      %p587 = scmp.le.s32.totalorder 2, %s14
      // Predicated region
      $region45: #{tpu_custom_call.1} parent=5 // pred_check
        %p588 = pneg %p587
      $region46: #{tpu_custom_call.1} parent=5 // pred_check_branch
        %590 = sbr.rel (%p588) target = $region48
      $region47: #{tpu_custom_call.1} parent=5 // pred_region
        %s591 = ssub.s32 %s14, 2
        // Predicated region
        $region49: #{tpu_custom_call.1} parent=47 // pred_check
          %p592 = pneg %p127
        $region50: #{tpu_custom_call.1} parent=47 // pred_check_branch
          %594 = sbr.rel (%p592) target = $region52
        $region51: #{tpu_custom_call.1} parent=47 // pred_region
          %s595 = sand.u32 %s112, 1
          %s596 = scalar_lea.sflag [#allocation3], %s595
          %s597 = sand.u32 %s112, 1
          %s598 = smul.addr %s597, 32
          %s599 = scalar_lea.vmem [#allocation7], %s598
          %601 = dma.done %s596, 512
        $region52: #{tpu_custom_call.1} parent=47 // pred_fallthru
          _
      $region48: #{tpu_custom_call.1} parent=5 // pred_fallthru
        _
    $region6: #{tpu_custom_call.1} parent=1 // loop_footer
      %s18 = sadd.s32 1, %s14
    $region7: #{tpu_custom_call.1} parent=1 // loop_footer_branch
      %13 = sbr.rel target = $region3
    $region8: #{tpu_custom_call.1} parent=1 // loop_exit
      _
    %602 = vsyncpa [#allocation3], 1
    %s603 = scalar_lea.sflag [#allocation3], 1
    %604 = vsyncpa %s603, 1
    %605 = vsyncpa [#allocation4], 1
    %s606 = scalar_lea.sflag [#allocation4], 1
    %607 = vsyncpa %s606, 1
    %608 = vsyncpa [#allocation6], 1

</llo_original>
